<compile_context>
chip_gen: v6e
topology: v6e:2x2x1
jax: 0.10.0
libtpu: 0.0.40
codegen_flags: <defaults>
</compile_context>

<pallas_src>
import jax
import jax.numpy as jnp
import numpy as np
from jax.experimental import pallas as pl
from jax.experimental.pallas import tpu as pltpu


def net_kernel(x_ref, c_ref, w1_ref, fc_ref, out_ref):
    # x_ref: (2, TB)   batch on lanes
    x0 = x_ref[0:1, :]                          # (1, TB)
    x1 = x_ref[1:2, :]                          # (1, TB)

    # Conv1d(1, k, kernel=2, stride=2, padding=1) on a length-2 signal:
    #   padded input = [0, x0, x1, 0]
    #   out[:, c, 0] = w[c,0,1] * x0 + b[c]   (left zero-pad pairs with x0)
    #   out[:, c, 1] = w[c,0,0] * x1 + b[c]   (x1 pairs with right zero-pad)
    cw0 = c_ref[:, 0:1]                         # (k, 1) tap 0
    cw1 = c_ref[:, 1:2]                         # (k, 1) tap 1
    cb = c_ref[:, 2:3]                          # (k, 1)
    y0 = jnp.maximum(cw1 * x0 + cb, 0.0)        # (k, TB)  ReLU
    y1 = jnp.maximum(cw0 * x1 + cb, 0.0)        # (k, TB)  ReLU

    # fc1 on channel-major flattened features (w1_ref columns pre-reordered
    # in the wrapper so stacking [y0; y1] matches the PyTorch flatten).
    y = jnp.concatenate([y0, y1], axis=0)       # (2k, TB)
    b1 = fc_ref[:, 0:1]                         # (m, 1)
    h = jnp.dot(w1_ref[...], y,
                preferred_element_type=jnp.float32) + b1    # (m, TB)
    h = jnp.maximum(h, 0.0)                                  # ReLU

    # fc2 (out features = 1): VPU multiply + sublane reduction, no MXU.
    w2 = fc_ref[:, 1:2]                         # (m, 1)
    b2 = fc_ref[0:1, 2:3]                       # (1, 1)
    out_ref[...] = jnp.sum(h * w2, axis=0, keepdims=True) + b2   # (1, TB)


def net_forward(x_ncl, params):
    """x_ncl: (B, 1, 2) float32; returns (B, 1) float32."""
    conv_w, conv_b = params["conv_w"], params["conv_b"]   # (k,1,2), (k,)
    fc1_w, fc1_b = params["fc1_w"], params["fc1_b"]       # (m,2k), (m,)
    fc2_w, fc2_b = params["fc2_w"], params["fc2_b"]       # (1,m),  (1,)

    B, C, L = x_ncl.shape
    assert C == 1 and L == 2, "kernel assumes Conv1d input of shape (B, 1, 2)"
    k = conv_w.shape[0]
    m = fc1_w.shape[0]

    # Batch tile: lane-aligned (multiple of 128), capped at 1024 rows.
    TB = min(1024, pl.cdiv(B, 128) * 128)
    B_pad = pl.cdiv(B, TB) * TB

    # --- glue: transpose + parameter packing (pure reshapes in JAX) ---
    xt = x_ncl[:, 0, :].T                                  # (2, B)  batch on lanes
    xt = jnp.pad(xt, ((0, 0), (0, B_pad - B)))             # (2, B_pad)

    # conv params packed: columns = [tap0, tap1, bias]
    c_packed = jnp.stack([conv_w[:, 0, 0], conv_w[:, 0, 1], conv_b], axis=1)  # (k, 3)
    # fc1 weight with columns reordered to match the [y0; y1] stacking
    # (channel-major flatten: feats[:,2c]=y0[:,c], feats[:,2c+1]=y1[:,c]).
    w1_packed = jnp.concatenate([fc1_w[:, 0::2], fc1_w[:, 1::2]], axis=1)     # (m, 2k)
    # fc params packed: columns = [b1, w2, b2-in-row-0]
    b2_col = jnp.zeros((m, 1), jnp.float32).at[0, 0].set(fc2_b[0])
    fc_packed = jnp.concatenate(
        [fc1_b.reshape(m, 1), fc2_w.T, b2_col], axis=1)                        # (m, 3)

    out_t = pl.pallas_call(
        net_kernel,
        out_shape=jax.ShapeDtypeStruct((1, B_pad), jnp.float32),
        grid=(B_pad // TB,),
        in_specs=[
            pl.BlockSpec((2, TB), lambda i: (0, i)),        # x tile
            pl.BlockSpec((k, 3), lambda i: (0, 0)),         # conv params (resident)
            pl.BlockSpec((m, 2 * k), lambda i: (0, 0)),     # fc1 weight (resident)
            pl.BlockSpec((m, 3), lambda i: (0, 0)),         # fc params (resident)
        ],
        out_specs=pl.BlockSpec((1, TB), lambda i: (0, i)),
        compiler_params=pltpu.CompilerParams(
            dimension_semantics=("parallel",)),
    )(xt, c_packed, w1_packed, fc_packed)

    return out_t[:, :B].T                                   # (B, 1)


def net_forward_ref(x_ncl, params):
    """Pure-JAX reference replicating the PyTorch forward exactly."""
    conv_w, conv_b = params["conv_w"], params["conv_b"]
    fc1_w, fc1_b = params["fc1_w"], params["fc1_b"]
    fc2_w, fc2_b = params["fc2_w"], params["fc2_b"]
    B = x_ncl.shape[0]
    pad = jnp.pad(x_ncl, ((0, 0), (0, 0), (1, 1)))            # (B,1,4)
    w2d = conv_w[:, 0, :]                                     # (k,2)
    t0 = pad[:, 0, 0:2] @ w2d.T                               # (B,k)
    t1 = pad[:, 0, 2:4] @ w2d.T                               # (B,k)
    conv = jnp.stack([t0, t1], axis=2) + conv_b[None, :, None]  # (B,k,2)
    conv = jnp.maximum(conv, 0.0)
    flat = conv.reshape(B, -1)                                # channel-major
    h = jnp.maximum(flat @ fc1_w.T + fc1_b, 0.0)
    return h @ fc2_w.T + fc2_b


def init_params(key, k, m):
    ks = jax.random.split(key, 6)
    return {
        "conv_w": jax.random.normal(ks[0], (k, 1, 2), jnp.float32) * 0.5,
        "conv_b": jax.random.normal(ks[1], (k,), jnp.float32) * 0.1,
        "fc1_w": jax.random.normal(ks[2], (m, 2 * k), jnp.float32) * 0.2,
        "fc1_b": jax.random.normal(ks[3], (m,), jnp.float32) * 0.1,
        "fc2_w": jax.random.normal(ks[4], (1, m), jnp.float32) * 0.2,
        "fc2_b": jax.random.normal(ks[5], (1,), jnp.float32) * 0.1,
    }


if __name__ == "__main__":
    k, m, L = 8, 32, 2
    key = jax.random.PRNGKey(0)
    kx, kp = jax.random.split(key)
    params = init_params(kp, k, m)

    # Small primary test plus a larger batch to exercise padding + multi-step grid.
    for B in (8, 2600):
        x = jax.random.normal(jax.random.fold_in(kx, B), (B, 1, L), jnp.float32)
        out = jax.block_until_ready(net_forward(x, params))
        ref = jax.block_until_ready(net_forward_ref(x, params))
        assert out.shape == (B, 1)
        np.testing.assert_allclose(np.asarray(out), np.asarray(ref),
                                   rtol=1e-5, atol=1e-5)
    print("KERNEL_OK")
</pallas_src>

<mosaic_0001>
module attributes {stable_mosaic.version = 11 : i64} {
  func.func @net_kernel(%arg0: i32, %arg1: memref<2x128xf32, #tpu.memory_space<vmem>>, %arg2: memref<8x3xf32, #tpu.memory_space<vmem>>, %arg3: memref<32x16xf32, #tpu.memory_space<vmem>>, %arg4: memref<32x3xf32, #tpu.memory_space<vmem>>, %arg5: memref<1x128xf32, #tpu.memory_space<vmem>>) attributes {dimension_semantics = [#tpu.dimension_semantics<parallel>], iteration_bounds = array<i64: 1>, scalar_prefetch = 0 : i64, scratch_operands = 0 : i64, tpu.core_type = #tpu.core_type<tc>, window_params = [{transform_indices = @transform_0, window_bounds = array<i64: 2, 128>}, {pipeline_mode = #tpu.pipeline_mode<synchronous>, transform_indices = @transform_1, window_bounds = array<i64: 8, 3>}, {pipeline_mode = #tpu.pipeline_mode<synchronous>, transform_indices = @transform_2, window_bounds = array<i64: 32, 16>}, {pipeline_mode = #tpu.pipeline_mode<synchronous>, transform_indices = @transform_3, window_bounds = array<i64: 32, 3>}, {transform_indices = @transform_4, window_bounds = array<i64: 1, 128>}]} {
    %c0 = arith.constant 0 : index
    %c0_0 = arith.constant 0 : index
    %0 = vector.load %arg1[%c0, %c0_0] : memref<2x128xf32, #tpu.memory_space<vmem>>, vector<1x128xf32>
    %c1 = arith.constant 1 : index
    %c0_1 = arith.constant 0 : index
    %1 = vector.load %arg1[%c1, %c0_1] : memref<2x128xf32, #tpu.memory_space<vmem>>, vector<1x128xf32>
    %c0_2 = arith.constant 0 : index
    %c0_3 = arith.constant 0 : index
    %2 = vector.load %arg2[%c0_2, %c0_3] : memref<8x3xf32, #tpu.memory_space<vmem>>, vector<8x1xf32>
    %c0_4 = arith.constant 0 : index
    %c1_5 = arith.constant 1 : index
    %3 = vector.load %arg2[%c0_4, %c1_5] : memref<8x3xf32, #tpu.memory_space<vmem>>, vector<8x1xf32>
    %c0_6 = arith.constant 0 : index
    %c2 = arith.constant 2 : index
    %4 = vector.load %arg2[%c0_6, %c2] : memref<8x3xf32, #tpu.memory_space<vmem>>, vector<8x1xf32>
    %5 = vector.broadcast %3 : vector<8x1xf32> to vector<8x128xf32>
    %6 = vector.broadcast %0 : vector<1x128xf32> to vector<8x128xf32>
    %7 = arith.mulf %5, %6 : vector<8x128xf32>
    %8 = vector.broadcast %4 : vector<8x1xf32> to vector<8x128xf32>
    %9 = arith.addf %7, %8 : vector<8x128xf32>
    %cst = arith.constant 0.000000e+00 : f32
    %10 = vector.broadcast %cst : f32 to vector<8x128xf32>
    %11 = arith.maximumf %9, %10 : vector<8x128xf32>
    %12 = vector.broadcast %2 : vector<8x1xf32> to vector<8x128xf32>
    %13 = vector.broadcast %1 : vector<1x128xf32> to vector<8x128xf32>
    %14 = arith.mulf %12, %13 : vector<8x128xf32>
    %15 = vector.broadcast %4 : vector<8x1xf32> to vector<8x128xf32>
    %16 = arith.addf %14, %15 : vector<8x128xf32>
    %cst_7 = arith.constant 0.000000e+00 : f32
    %17 = vector.broadcast %cst_7 : f32 to vector<8x128xf32>
    %18 = arith.maximumf %16, %17 : vector<8x128xf32>
    %19 = tpu.concatenate %11, %18 in 0 : vector<8x128xf32>, vector<8x128xf32> -> vector<16x128xf32>
    %c0_8 = arith.constant 0 : index
    %c0_9 = arith.constant 0 : index
    %20 = vector.load %arg4[%c0_8, %c0_9] : memref<32x3xf32, #tpu.memory_space<vmem>>, vector<32x1xf32>
    %c0_10 = arith.constant 0 : index
    %c0_11 = arith.constant 0 : index
    %21 = vector.load %arg3[%c0_10, %c0_11] : memref<32x16xf32, #tpu.memory_space<vmem>>, vector<32x16xf32>
    %cst_12 = arith.constant dense<0.000000e+00> : vector<32x128xf32>
    %22 = tpu.matmul %21, %19, %cst_12 {dimension_numbers = #tpu.dot_dimension_numbers<[1], [0], [0], [1], [0, 0, 1, 1], [], []>} : vector<32x16xf32>, vector<16x128xf32>, vector<32x128xf32> -> vector<32x128xf32>
    %23 = vector.broadcast %20 : vector<32x1xf32> to vector<32x128xf32>
    %24 = arith.addf %22, %23 : vector<32x128xf32>
    %cst_13 = arith.constant 0.000000e+00 : f32
    %25 = vector.broadcast %cst_13 : f32 to vector<32x128xf32>
    %26 = arith.maximumf %24, %25 : vector<32x128xf32>
    %c0_14 = arith.constant 0 : index
    %c1_15 = arith.constant 1 : index
    %27 = vector.load %arg4[%c0_14, %c1_15] : memref<32x3xf32, #tpu.memory_space<vmem>>, vector<32x1xf32>
    %c0_16 = arith.constant 0 : index
    %c2_17 = arith.constant 2 : index
    %28 = vector.load %arg4[%c0_16, %c2_17] : memref<32x3xf32, #tpu.memory_space<vmem>>, vector<1x1xf32>
    %29 = vector.broadcast %27 : vector<32x1xf32> to vector<32x128xf32>
    %30 = arith.mulf %26, %29 : vector<32x128xf32>
    %cst_18 = arith.constant dense<0.000000e+00> : vector<128xf32>
    %31 = vector.multi_reduction <add>, %30, %cst_18 [0] : vector<32x128xf32> to vector<128xf32>
    %32 = vector.shape_cast %31 : vector<128xf32> to vector<1x128xf32>
    %33 = vector.broadcast %28 : vector<1x1xf32> to vector<1x128xf32>
    %34 = arith.addf %32, %33 : vector<1x128xf32>
    %c0_19 = arith.constant 0 : index
    %c0_20 = arith.constant 0 : index
    %35 = vector.load %arg5[%c0_19, %c0_20] : memref<1x128xf32, #tpu.memory_space<vmem>>, vector<1x128xf32>
    tpu.vector_store %arg5[%c0_19, %c0_20], %34 {strides = array<i32>} : memref<1x128xf32, #tpu.memory_space<vmem>>, vector<1x128xf32>,
    return
  }
  func.func @transform_0(%arg0: i32) -> (i32, i32) {
    %c0_i32 = arith.constant 0 : i32
    %c0_i32_0 = arith.constant 0 : i32
    return %c0_i32, %arg0 : i32, i32
  }
  func.func @transform_1(%arg0: i32) -> (i32, i32) {
    %c0_i32 = arith.constant 0 : i32
    %c0_i32_0 = arith.constant 0 : i32
    %c0_i32_1 = arith.constant 0 : i32
    return %c0_i32, %c0_i32_0 : i32, i32
  }
  func.func @transform_2(%arg0: i32) -> (i32, i32) {
    %c0_i32 = arith.constant 0 : i32
    %c0_i32_0 = arith.constant 0 : i32
    %c0_i32_1 = arith.constant 0 : i32
    return %c0_i32, %c0_i32_0 : i32, i32
  }
  func.func @transform_3(%arg0: i32) -> (i32, i32) {
    %c0_i32 = arith.constant 0 : i32
    %c0_i32_0 = arith.constant 0 : i32
    %c0_i32_1 = arith.constant 0 : i32
    return %c0_i32, %c0_i32_0 : i32, i32
  }
  func.func @transform_4(%arg0: i32) -> (i32, i32) {
    %c0_i32 = arith.constant 0 : i32
    %c0_i32_0 = arith.constant 0 : i32
    return %c0_i32, %arg0 : i32, i32
  }
}

</mosaic_0001>

<llo_original>
// kernel: tpu_custom_call.1
$region0: #{tpu_custom_call.1}
  #allocation0 [shape = 'u32[]', space=smem, size = 0x4, offset = 0x4, fixed_abs, tag = 'smem constant byte address 0x4 - core index']
  #allocation1 [shape = 'u32[144,128]{1,0:T(1,128)}', space=vmem, size = 0x12000, scoped, tag = 'internal scratch']
  %s0 = inlined_call_operand.vmem [shape: f32[2,128], index: 0, kind: input, shape index: {}]
  %s1 = inlined_call_operand.vmem [shape: f32[8,3], index: 1, kind: input, shape index: {}]
  %s2 = inlined_call_operand.vmem [shape: f32[32,16], index: 2, kind: input, shape index: {}]
  %s3 = inlined_call_operand.vmem [shape: f32[32,3], index: 3, kind: input, shape index: {}]
  %s4 = inlined_call_operand.hbm [shape: f32[1,128], index: 4, kind: output, shape index: {}]
  %s5 = sld [smem:[#allocation0]]
  $region26: #{tpu_custom_call.1} parent=0
    _
  %s7 = ssub.s32 1, %s5
  %s8 = scalar_select 0, %s7, %s5
  $region1: #{tpu_custom_call.1} parent=0
    #allocation2 [shape = 'u8[512]{0}', space=vmem, size = 0x400, scoped, tag = 'output window, operand 0, single buffered']
    #allocation3 [shape = 's32[1]{0}', space=sflag, size = 0x4, scoped, tag = 'scoped memory for tpu_custom_call.1']
    %9 = vsyncpa [#allocation3], 0
    // Predicated region
    $region2: #{tpu_custom_call.1} parent=1 // pred_check
      _
    $region3: #{tpu_custom_call.1} parent=1 // pred_check_branch
      %11 = sbr.rel (0) target = $region5
    $region4: #{tpu_custom_call.1} parent=1 // pred_region
      _
    $region5: #{tpu_custom_call.1} parent=1 // pred_fallthru
      _
    // Predicated region
    $region6: #{tpu_custom_call.1} parent=1 // pred_check
      _
    $region7: #{tpu_custom_call.1} parent=1 // pred_check_branch
      %13 = sbr.rel (0) target = $region9
    $region8: #{tpu_custom_call.1} parent=1 // pred_region
      _
    $region9: #{tpu_custom_call.1} parent=1 // pred_fallthru
      _
    // Predicated region
    $region10: #{tpu_custom_call.1} parent=1 // pred_check
      _
    $region11: #{tpu_custom_call.1} parent=1 // pred_check_branch
      %15 = sbr.rel (0) target = $region13
    $region12: #{tpu_custom_call.1} parent=1 // pred_region
      _
    $region13: #{tpu_custom_call.1} parent=1 // pred_fallthru
      _
    // Predicated region
    $region14: #{tpu_custom_call.1} parent=1 // pred_check
      _
    $region15: #{tpu_custom_call.1} parent=1 // pred_check_branch
      %17 = sbr.rel (0) target = $region17
    $region16: #{tpu_custom_call.1} parent=1 // pred_region
      _
    $region17: #{tpu_custom_call.1} parent=1 // pred_fallthru
      _
    %v18 = vld [vmem:[%s0] sm:$0x1]
    %v19 = vld [vmem:[%s0 + $0x1] sm:$0x1]
    %v20 = vld [vmem:[%s1] sm:$0xff]
    %22 = vset.pattern.permute.xlu0 1
    %23 = vperm.xlu0 %22, %v20
    %v24 = vpop.permute.xlu0 %23
    %v26 = vlaneseq
    %v27 = vshrl.u32 %v26, 7
    %v28 = vsub.s32 0, %v27
    %v29 = vrot.slane %v18, %v28
    %v30 = vmul.f32 %v24, %v29
    %31 = vset.pattern.permute.xlu0 2
    %32 = vperm.xlu0 %31, %v20
    %v33 = vpop.permute.xlu0 %32
    %v35 = vadd.f32 %v30, %v33
    %v36 = vmax.f32 %v35, 0.0
    %37 = vset.pattern.permute.xlu0 0
    %38 = vperm.xlu0 %37, %v20
    %v39 = vpop.permute.xlu0 %38
    %v41 = vlaneseq
    %v42 = vshrl.u32 %v41, 7
    %v43 = vsub.s32 0, %v42
    %v44 = vrot.slane %v19, %v43
    %v45 = vmul.f32 %v39, %v44
    %v46 = vadd.f32 %v45, %v33
    %v47 = vmax.f32 %v46, 0.0
    %v48 = vld [vmem:[%s3] sm:$0xff]
    %v49 = vld [vmem:[%s3 + $0x8] sm:$0xff]
    %v50 = vld [vmem:[%s3 + $0x10] sm:$0xff]
    %v51 = vld [vmem:[%s3 + $0x18] sm:$0xff]
    %v52 = vld [vmem:[%s2] sm:$0xff]
    %v53 = vld [vmem:[%s2 + $0x8] sm:$0xff]
    %v54 = vld [vmem:[%s2 + $0x10] sm:$0xff]
    %v55 = vld [vmem:[%s2 + $0x18] sm:$0xff]
    %57 = vset.pattern.permute.xlu0 0
    %58 = vperm.xlu0 %57, %v48
    %v59 = vpop.permute.xlu0 %58
    %62 = vset.pattern.permute.xlu0 0
    %63 = vperm.xlu0 %62, %v49
    %v64 = vpop.permute.xlu0 %63
    %67 = vset.pattern.permute.xlu0 0
    %68 = vperm.xlu0 %67, %v50
    %v69 = vpop.permute.xlu0 %68
    %72 = vset.pattern.permute.xlu0 0
    %73 = vperm.xlu0 %72, %v51
    %v74 = vpop.permute.xlu0 %73
    %vm76 = vcmask 130048
    %v78 = vsel %vm76, %v52, 0
    %v81 = vsel %vm76, %v53, 0
    %v84 = vsel %vm76, %v54, 0
    %v87 = vsel %vm76, %v55, 0
    %89 = vmatprep.subr.mxu0 0.0
    %90 = vmatpush1.msra.mxu0 0.0
    %91 = vmatprep.subr.mxu0 0.0
    %92 = vmatpush1.msra.mxu0 0.0
    %93 = vmatprep.subr.mxu0 0.0
    %94 = vmatpush1.msra.mxu0 0.0
    %95 = vmatprep.subr.mxu0 0.0
    %96 = vmatpush1.msra.mxu0 0.0
    %97 = vmatprep.subr.mxu0 0.0
    %98 = vmatpush1.msra.mxu0 0.0
    %99 = vmatprep.subr.mxu0 0.0
    %100 = vmatpush1.msra.mxu0 0.0
    %101 = vmatprep.subr.mxu0 0.0
    %102 = vmatpush1.msra.mxu0 0.0
    %103 = vmatprep.subr.mxu0 0.0
    %104 = vmatpush1.msra.mxu0 0.0
    %105 = vmatprep.subr.mxu0 0.0
    %106 = vmatpush1.msra.mxu0 0.0
    %107 = vmatprep.subr.mxu0 0.0
    %108 = vmatpush1.msra.mxu0 0.0
    %109 = vmatprep.subr.mxu0 0.0
    %110 = vmatpush1.msra.mxu0 0.0
    %111 = vmatprep.subr.mxu0 0.0
    %112 = vmatpush1.msra.mxu0 0.0
    %113 = vmatprep.subr.mxu0 0.0
    %114 = vmatpush1.msra.mxu0 0.0
    %115 = vmatprep.subr.mxu0 0.0
    %116 = vmatpush1.msra.mxu0 0.0
    %117 = vmatprep.subr.mxu0 0.0
    %118 = vmatpush1.msra.mxu0 %v47
    %119 = vmatprep.subr.mxu0 0.0
    %120 = vmatpush1.msra.mxu0 %v36
    %121 = vmatprep.subr.mxu0 0.0
    %122 = vmatpush2.msra.mxu0 0.0
    %123 = vmatprep.subr.mxu0 0.0
    %124 = vmatpush2.msra.mxu0 0.0
    %125 = vmatprep.subr.mxu0 0.0
    %126 = vmatpush2.msra.mxu0 0.0
    %127 = vmatprep.subr.mxu0 0.0
    %128 = vmatpush2.msra.mxu0 0.0
    %129 = vmatprep.subr.mxu0 0.0
    %130 = vmatpush2.msra.mxu0 0.0
    %131 = vmatprep.subr.mxu0 0.0
    %132 = vmatpush2.msra.mxu0 0.0
    %133 = vmatprep.subr.mxu0 0.0
    %134 = vmatpush2.msra.mxu0 0.0
    %135 = vmatprep.subr.mxu0 0.0
    %136 = vmatpush2.msra.mxu0 0.0
    %137 = vmatprep.subr.mxu0 0.0
    %138 = vmatpush2.msra.mxu0 0.0
    %139 = vmatprep.subr.mxu0 0.0
    %140 = vmatpush2.msra.mxu0 0.0
    %141 = vmatprep.subr.mxu0 0.0
    %142 = vmatpush2.msra.mxu0 0.0
    %143 = vmatprep.subr.mxu0 0.0
    %144 = vmatpush2.msra.mxu0 0.0
    %145 = vmatprep.subr.mxu0 0.0
    %146 = vmatpush2.msra.mxu0 0.0
    %147 = vmatprep.subr.mxu0 0.0
    %148 = vmatpush2.msra.mxu0 0.0
    %149 = vmatprep.subr.mxu0 0.0
    %150 = vmatpush2.msra.mxu0 0.0
    %151 = vmatprep.subr.mxu0 0.0
    %152 = vmatpush2.msra.mxu0 0.0
    %153 = vmatprep.mubr.f32.mxu0 0.0
    %154 = vmatmul.mubr.f32.gmra.mxu0 %v78
    %v155 = vpop.f32.mrf.mxu0
    %v156 = vadd.f32 %v59, %v155
    %v157 = vpop.f32.mrf.mxu0
    %158 = vmatprep.mubr.f32.mxu0 0.0
    %159 = vmatmul.mubr.f32.gmra.mxu0 %v81
    %v160 = vpop.f32.mrf.mxu0
    %v161 = vadd.f32 %v64, %v160
    %v162 = vpop.f32.mrf.mxu0
    %163 = vmatprep.mubr.f32.mxu0 0.0
    %164 = vmatmul.mubr.f32.gmra.mxu0 %v84
    %v165 = vpop.f32.mrf.mxu0
    %v166 = vadd.f32 %v69, %v165
    %v167 = vpop.f32.mrf.mxu0
    %168 = vmatprep.mubr.f32.mxu0 0.0
    %169 = vmatmul.mubr.f32.gmra.mxu0 %v87
    %v170 = vpop.f32.mrf.mxu0
    %v171 = vadd.f32 %v74, %v170
    %v172 = vpop.f32.mrf.mxu0
    %173 = vdwg.mxu0
    %v174 = vmax.f32 %v156, 0.0
    %v175 = vmax.f32 %v161, 0.0
    %v176 = vmax.f32 %v166, 0.0
    %v177 = vmax.f32 %v171, 0.0
    %v178 = vld [vmem:[%s3] sm:$0x1]
    %179 = vset.pattern.permute.xlu0 1
    %180 = vperm.xlu0 %179, %v48
    %v181 = vpop.permute.xlu0 %180
    %183 = vset.pattern.permute.xlu0 1
    %184 = vperm.xlu0 %183, %v49
    %v185 = vpop.permute.xlu0 %184
    %187 = vset.pattern.permute.xlu0 1
    %188 = vperm.xlu0 %187, %v50
    %v189 = vpop.permute.xlu0 %188
    %191 = vset.pattern.permute.xlu0 1
    %192 = vperm.xlu0 %191, %v51
    %v193 = vpop.permute.xlu0 %192
    %v195 = vmul.f32 %v174, %v181
    %v196 = vmul.f32 %v175, %v185
    %v197 = vmul.f32 %v176, %v189
    %v198 = vmul.f32 %v177, %v193
    %v199 = vadd.f32 %v195, %v196
    %v200 = vadd.f32 %v199, %v197
    %v201 = vadd.f32 %v200, %v198
    %v202 = vrot.slane %v201, 4
    %v203 = vadd.f32 %v201, %v202
    %v204 = vrot.slane %v203, 2
    %v205 = vadd.f32 %v203, %v204
    %v206 = vrot.slane %v205, 1
    %v207 = vadd.f32 %v205, %v206
    %209 = vset.pattern.permute.xlu0 2
    %210 = vperm.xlu0 %209, %v178
    %v211 = vpop.permute.xlu0 %210
    %v213 = vadd.f32 %v207, %v211
    %214 = vst [vmem:[#allocation2] sm:$0x1] %v213
    // Predicated region
    $region18: #{tpu_custom_call.1} parent=1 // pred_check
      _
    $region19: #{tpu_custom_call.1} parent=1 // pred_check_branch
      %216 = sbr.rel (0) target = $region21
    $region20: #{tpu_custom_call.1} parent=1 // pred_region
      %s218 = ssub.s32 16, 16
      %219 = vsyncadd [#allocation3], %s218
      %s221 = sshll.u32 [#allocation2], 4
      %s222 = int_to_ptr.vmem [resolvable:$true] %s221
      %224 = dma.vmem_to_hbm [thread:$0]  %s222, 16, %s4, [#allocation3]
    $region21: #{tpu_custom_call.1} parent=1 // pred_fallthru
      _
    // Predicated region
    $region22: #{tpu_custom_call.1} parent=1 // pred_check
      _
    $region23: #{tpu_custom_call.1} parent=1 // pred_check_branch
      %226 = sbr.rel (0) target = $region25
    $region24: #{tpu_custom_call.1} parent=1 // pred_region
      %227 = dma.done [#allocation3], 16
    $region25: #{tpu_custom_call.1} parent=1 // pred_fallthru
      _
    %228 = vsyncpa [#allocation3], 1

</llo_original>
